<compile_context>
chip_gen: v5e
topology: v5e:2x2
jax: 0.10.0
libtpu: 0.0.40
codegen_flags: <defaults>
</compile_context>

<pallas_src>
import jax
import jax.numpy as jnp
from jax.experimental import pallas as pl
from jax.experimental.pallas import tpu as pltpu


def _antirelu_kernel(x_ref, o_ref):
    o_ref[...] = jnp.minimum(x_ref[...], 0)


_SMALL_BYTES = 512 * 1024               # below this: one whole-array block
_TARGET_BLOCK_BYTES = 2 * 1024 * 1024   # ~2 MiB blocks in the tiled path
_SUB = 32                               # row-tile granularity (covers f32/bf16/int8/fp8)


def _round_up(x, m):
    return (x + m - 1) // m * m


def antirelu(s):
    """Elementwise min(0, s). Any shape, any float dtype."""
    orig_shape, dtype = s.shape, s.dtype
    n = s.size
    if n == 0:
        return s
    itemsize = jnp.dtype(dtype).itemsize

    flat = s.reshape(-1)

    # Widest lane-dense width that divides n -> no pad copy needed.
    width = None
    for w in (1024, 512, 256, 128):
        if n % w == 0:
            width = w
            break
    pad = 0
    if width is None:
        width = 128
        pad = (-n) % width              # rare path: pad costs one extra HBM copy
        flat = jnp.pad(flat, (0, pad))
    rows = flat.size // width
    x2d = flat.reshape(rows, width)     # contiguous reshape: free

    nbytes = rows * width * itemsize

    if nbytes <= _SMALL_BYTES:
        # Whole array as one VMEM block, grid=().  (For tensors this tiny a
        # fused jnp.minimum(s, 0) would beat any kernel; kept as Pallas per spec.)
        out2d = pl.pallas_call(
            _antirelu_kernel,
            out_shape=jax.ShapeDtypeStruct((rows, width), dtype),
        )(x2d)
    else:
        # Tiled path: ~2 MiB blocks, row tile multiple of 32, capped so the
        # grid always has >= 2 "parallel" steps.
        tr = _TARGET_BLOCK_BYTES // (width * itemsize)
        tr = max(_SUB, tr // _SUB * _SUB)
        tr = min(tr, _round_up(pl.cdiv(rows, 2), _SUB))
        grid = (pl.cdiv(rows, tr),)     # uneven tail handled by masked writeback

        out2d = pl.pallas_call(
            _antirelu_kernel,
            out_shape=jax.ShapeDtypeStruct((rows, width), dtype),
            grid_spec=pltpu.PrefetchScalarGridSpec(
                num_scalar_prefetch=0,
                grid=grid,
                in_specs=[pl.BlockSpec((tr, width), lambda i: (i, 0))],
                out_specs=pl.BlockSpec((tr, width), lambda i: (i, 0)),
            ),
            compiler_params=pltpu.CompilerParams(
                dimension_semantics=("parallel",)
            ),
            cost_estimate=pl.CostEstimate(
                flops=n, transcendentals=0, bytes_accessed=2 * n * itemsize
            ),
        )(x2d)

    out_flat = out2d.reshape(-1)
    if pad:
        out_flat = out_flat[:n]
    return out_flat.reshape(orig_shape)


if __name__ == "__main__":
    key = jax.random.PRNGKey(0)

    # Module's shape: NCHW (2, 4, 16, 16) — exercises the small single-block path.
    x = jax.random.normal(key, (2, 4, 16, 16), dtype=jnp.float32)
    out = jax.block_until_ready(antirelu(x))
    ref = jnp.minimum(jnp.zeros_like(x), x)
    assert out.shape == x.shape and out.dtype == x.dtype
    assert jnp.allclose(out, ref), "small-path mismatch vs reference"

    # Larger input exercising the tiled path (uneven row tail, masked writeback).
    x2 = jax.random.normal(jax.random.PRNGKey(1), (3, 5, 128, 128), dtype=jnp.float32)
    out2 = jax.block_until_ready(antirelu(x2))
    ref2 = jnp.minimum(jnp.zeros_like(x2), x2)
    assert jnp.allclose(out2, ref2), "tiled-path mismatch vs reference"

    print("KERNEL_OK")
</pallas_src>

<mosaic_0001>
module attributes {stable_mosaic.version = 11 : i64} {
  func.func @_antirelu_kernel(%arg0: memref<2x1024xf32, #tpu.memory_space<vmem>>, %arg1: memref<2x1024xf32, #tpu.memory_space<vmem>>) attributes {dimension_semantics = [], scalar_prefetch = 0 : i64, scratch_operands = 0 : i64, tpu.core_type = #tpu.core_type<tc>} {
    %c0 = arith.constant 0 : index
    %c0_0 = arith.constant 0 : index
    %0 = vector.load %arg0[%c0, %c0_0] : memref<2x1024xf32, #tpu.memory_space<vmem>>, vector<2x1024xf32>
    %cst = arith.constant 0.000000e+00 : f32
    %1 = vector.broadcast %cst : f32 to vector<2x1024xf32>
    %2 = arith.minimumf %0, %1 : vector<2x1024xf32>
    %c0_1 = arith.constant 0 : index
    %c0_2 = arith.constant 0 : index
    %3 = vector.load %arg1[%c0_1, %c0_2] : memref<2x1024xf32, #tpu.memory_space<vmem>>, vector<2x1024xf32>
    tpu.vector_store %arg1[%c0_1, %c0_2], %2 {strides = array<i32>} : memref<2x1024xf32, #tpu.memory_space<vmem>>, vector<2x1024xf32>,
    return
  }
}

</mosaic_0001>

<llo_original>
// kernel: tpu_custom_call.1
$region0: #{tpu_custom_call.1}
  #allocation0 [shape = 'u32[]', space=smem, size = 0x4, offset = 0x4, fixed_abs, tag = 'smem constant byte address 0x4 - core index']
  #allocation1 [shape = 'u32[72,128]{1,0:T(1,128)}', space=vmem, size = 0x9000, scoped, tag = 'internal scratch']
  %s0 = inlined_call_operand.hbm [shape: f32[2,1024], index: 0, kind: input, shape index: {}]
  %s1 = inlined_call_operand.hbm [shape: f32[2,1024], index: 1, kind: output, shape index: {}]
  %s2 = sld [smem:[#allocation0]]
  $region18: #{tpu_custom_call.1} parent=0
    _
  %s4 = ssub.s32 1, %s2
  %s5 = scalar_select 0, %s4, %s2
  $region1: #{tpu_custom_call.1} parent=0
    #allocation2 [shape = 'u8[8192]{0}', space=vmem, size = 0x2000, scoped, tag = 'input window, operand 0, single buffered']
    #allocation3 [shape = 's32[1]{0}', space=sflag, size = 0x4, scoped, tag = 'scoped memory for tpu_custom_call.1']
    #allocation4 [shape = 's32[1]{0}', space=sflag, size = 0x4, scoped, tag = 'scoped memory for tpu_custom_call.1']
    #allocation5 [shape = 'u8[8192]{0}', space=vmem, size = 0x2000, scoped, tag = 'output window, operand 0, single buffered']
    %6 = vsyncpa [#allocation3], 0
    %7 = vsyncpa [#allocation4], 0
    // Predicated region
    $region2: #{tpu_custom_call.1} parent=1 // pred_check
      _
    $region3: #{tpu_custom_call.1} parent=1 // pred_check_branch
      %9 = sbr.rel (0) target = $region5
    $region4: #{tpu_custom_call.1} parent=1 // pred_region
      %11 = vsyncadd [#allocation3], 0
      %s13 = sshll.u32 %s0, 4
      %s14 = int_to_ptr.hbm [resolvable:$true] %s13
      %s15 = sshll.u32 [#allocation2], 4
      %s16 = int_to_ptr.vmem [resolvable:$true] %s15
      %18 = dma.hbm_to_vmem [thread:$0]  %s14, 256, %s16, [#allocation3]
    $region5: #{tpu_custom_call.1} parent=1 // pred_fallthru
      _
    // Predicated region
    $region6: #{tpu_custom_call.1} parent=1 // pred_check
      _
    $region7: #{tpu_custom_call.1} parent=1 // pred_check_branch
      %20 = sbr.rel (0) target = $region9
    $region8: #{tpu_custom_call.1} parent=1 // pred_region
      %22 = dma.done [#allocation3], 256
    $region9: #{tpu_custom_call.1} parent=1 // pred_fallthru
      _
    %v23 = vld [vmem:[#allocation2] sm:$0xff]
    %v24 = vld [vmem:[#allocation2 + $0x8] sm:$0xff]
    %v25 = vmin.f32 %v23, 0.0
    %v26 = vmin.f32 %v24, 0.0
    %27 = vst [vmem:[#allocation5] sm:$0xff] %v25
    %28 = vst [vmem:[#allocation5 + $0x8] sm:$0xff] %v26
    // Predicated region
    $region10: #{tpu_custom_call.1} parent=1 // pred_check
      _
    $region11: #{tpu_custom_call.1} parent=1 // pred_check_branch
      %30 = sbr.rel (0) target = $region13
    $region12: #{tpu_custom_call.1} parent=1 // pred_region
      %32 = vsyncadd [#allocation4], 0
      %s34 = sshll.u32 [#allocation5], 4
      %s35 = int_to_ptr.vmem [resolvable:$true] %s34
      %s36 = sshll.u32 %s1, 4
      %s37 = int_to_ptr.hbm [resolvable:$true] %s36
      %39 = dma.vmem_to_hbm [thread:$0]  %s35, 256, %s37, [#allocation4]
    $region13: #{tpu_custom_call.1} parent=1 // pred_fallthru
      _
    // Predicated region
    $region14: #{tpu_custom_call.1} parent=1 // pred_check
      _
    $region15: #{tpu_custom_call.1} parent=1 // pred_check_branch
      %41 = sbr.rel (0) target = $region17
    $region16: #{tpu_custom_call.1} parent=1 // pred_region
      %43 = dma.done [#allocation4], 256
    $region17: #{tpu_custom_call.1} parent=1 // pred_fallthru
      _
    %44 = vsyncpa [#allocation3], 1
    %45 = vsyncpa [#allocation4], 1

</llo_original>
